<compile_context>
chip_gen: v7x
topology: tpu7x:2x2x1
jax: 0.10.0
libtpu: 0.0.40
codegen_flags: <defaults>
</compile_context>

<pallas_src>
import jax
import jax.numpy as jnp
from jax import lax
from jax.experimental import pallas as pl
from jax.experimental.pallas import tpu as pltpu

LRELU_SLOPE = 0.2

# Architecture constants implied by the module skeleton.
CIN = 4                        # x input channels
C0, C1, C2 = 16, 32, 32        # x-path conv output channels
K0, K1, K2 = 4, 4, 2           # x-path kernel sizes
S0, S1 = 2, 2                  # x-path strides (last conv stride 1)
LATENT = 64                    # z channels
CZ = 32                        # z-path hidden/output channels
CXZ = 32                       # xz hidden channels

# MXU operand dtype (perf feedback: bf16 on v6e/v7x; f32 accumulation is kept via
# preferred_element_type; VPU math stays f32 for v5e).
MXU_DTYPE = jnp.bfloat16

# ---- weight slab layout: one lane-dense bf16 slab, one DMA -------------------
_SEGS = (("w0", K0 * K0 * CIN),     # conv x0  (im2col K=64,  stored in lanes [0:C0])
         ("w1", K1 * K1 * C0),      # conv x1  (im2col K=256)
         ("w2", K2 * K2 * C1),      # conv x2  (im2col K=128)
         ("wz0", LATENT),           # z0 1x1
         ("wz1", CZ),               # z1 1x1
         ("wxz0x", C2),             # xz0 rows multiplying h_x (concat fusion)
         ("wxz0z", CZ))             # xz0 rows multiplying h_z
_OFF = {}
_acc = 0
for _name, _n in _SEGS:
    _OFF[_name] = (_acc, _n)
    _acc += _n
W_ROWS = _acc                       # 608
W_COLS = 32

# ---- bias slab layout: one small f32 slab ------------------------------------
B_X0, B_X1, B_X2, B_Z0, B_Z1, B_XZ0, W_XZ1, B_XZ1 = range(8)
B_ROWS, B_COLS = 8, 32


# ------------------------------------------------------------------------------
# Kernel helpers
# ------------------------------------------------------------------------------
def _lrelu(v):
    return jnp.where(v >= 0.0, v, LRELU_SLOPE * v)


def _dot(a, b):
    return jnp.dot(a, b, preferred_element_type=jnp.float32)


def _w(w_ref, name, ncols=W_COLS):
    o, n = _OFF[name]
    return w_ref[o:o + n, 0:ncols]


def _b(b_ref, row, ncols=B_COLS):
    return b_ref[row:row + 1, 0:ncols]


# ------------------------------------------------------------------------------
# Fused Pallas kernel: whole discriminator forward, intermediates in VMEM/vregs.
# ------------------------------------------------------------------------------
def _fused_disc_kernel(p0g_ref, zf_ref, w_ref, b_ref, o_ref, h0w_ref, h1w_ref):
    n1 = h0w_ref.shape[0]     # K2*K2*B : rows of the x1 im2col matmul
    nb = h1w_ref.shape[0]     # B       : rows of the x2 im2col matmul

    # ---- x path --------------------------------------------------------------
    # x0: ONE matmul over every (conv1-offset, conv2-offset, batch) patch row.
    h0 = _lrelu(_dot(p0g_ref[...], _w(w_ref, "w0", C0)) + _b(b_ref, B_X0, C0))

    # fold the K1*K1 conv1 offsets into lanes -> [n1, 256] (K multiple of 128)
    for t in range(K1 * K1):
        h0w_ref[:, C0 * t:C0 * (t + 1)] = h0[n1 * t:n1 * (t + 1), :]

    # x1: single K=256 im2col matmul
    w1 = _w(w_ref, "w1")
    h1 = _lrelu(_dot(h0w_ref[...].astype(w1.dtype), w1) + _b(b_ref, B_X1))

    # fold the K2*K2 conv2 offsets into lanes -> [B, 128]
    for t in range(K2 * K2):
        h1w_ref[:, C1 * t:C1 * (t + 1)] = h1[nb * t:nb * (t + 1), :]

    # x2: single K=128 im2col matmul
    w2 = _w(w_ref, "w2")
    h_x = _lrelu(_dot(h1w_ref[...].astype(w2.dtype), w2) + _b(b_ref, B_X2))

    # ---- z path (1x1 convs == plain matmuls) ----------------------------------
    wz0 = _w(w_ref, "wz0")
    wz1 = _w(w_ref, "wz1")
    h_z = _lrelu(_dot(zf_ref[...], wz0) + _b(b_ref, B_Z0))
    h_z = _lrelu(_dot(h_z.astype(wz1.dtype), wz1) + _b(b_ref, B_Z1))

    # ---- xz path: channel concat fused into split-weight matmuls --------------
    wx = _w(w_ref, "wxz0x")
    wz = _w(w_ref, "wxz0z")
    h_xz = _lrelu(_dot(h_x.astype(wx.dtype), wx)
                  + _dot(h_z.astype(wz.dtype), wz)
                  + _b(b_ref, B_XZ0))

    # final 32->1 conv: f32 VPU multiply + lane reduction (no N=1 MXU push);
    # this is the only HBM store of the whole forward.
    out = (jnp.sum(h_xz * _b(b_ref, W_XZ1), axis=-1, keepdims=True)
           + _b(b_ref, B_XZ1, 1))
    o_ref[...] = out.astype(o_ref.dtype)


# ------------------------------------------------------------------------------
# Wrapper-side glue (runs once on the raw input / weights)
# ------------------------------------------------------------------------------
def _flatw(w):
    """PyTorch conv weight [OC, IC, KH, KW] -> im2col operand [KH*KW*IC, OC]."""
    return jnp.transpose(w, (2, 3, 1, 0)).reshape(-1, w.shape[0])


def _pack_weight_slab(params):
    w0 = _flatw(params["x0"][0])                       # [64, 16]
    w0 = jnp.pad(w0, ((0, 0), (0, W_COLS - w0.shape[1])))
    wxz0 = _flatw(params["xz0"][0])                    # [64, 32]
    segs = {"w0": w0,
            "w1": _flatw(params["x1"][0]),             # [256, 32]
            "w2": _flatw(params["x2"][0]),             # [128, 32]
            "wz0": _flatw(params["z0"][0]),            # [64, 32]
            "wz1": _flatw(params["z1"][0]),            # [32, 32]
            "wxz0x": wxz0[:C2],                        # multiplies h_x
            "wxz0z": wxz0[C2:]}                        # multiplies h_z
    slab = jnp.concatenate([segs[name] for name, _ in _SEGS], axis=0)
    assert slab.shape == (W_ROWS, W_COLS), slab.shape
    return slab.astype(MXU_DTYPE)


def _pack_bias_slab(params):
    def row(v):
        v = v.reshape(-1).astype(jnp.float32)
        return jnp.pad(v, (0, B_COLS - v.shape[0])).reshape(1, B_COLS)
    rows = [row(params["x0"][1]), row(params["x1"][1]), row(params["x2"][1]),
            row(params["z0"][1]), row(params["z1"][1]), row(params["xz0"][1]),
            row(params["xz1"][0][:, :, 0, 0].reshape(-1)),   # final 1x1 weight vec
            row(params["xz1"][1])]
    slab = jnp.concatenate(rows, axis=0)
    assert slab.shape == (B_ROWS, B_COLS), slab.shape
    return slab


def _pregather_x(x):
    """Fused x-path im2col operand.

    Row (t1, t2, b) holds the 64-feature conv-x0 input patch at conv-x0 output
    position (S1*i2+i1, S1*j2+j1), where t1=(i1,j1) is the conv-x1 kernel offset
    and t2=(i2,j2) the conv-x2 kernel offset (== conv-x1 output pixel).  Row
    selection commutes with the per-row x0 matmul + LeakyReLU, so this replaces
    the previous dense 0/1 selection matmuls with pure wrapper-side indexing.
    """
    B, C, H, W = x.shape
    oh0, ow0 = (H - K0) // S0 + 1, (W - K0) // S0 + 1
    oh1, ow1 = (oh0 - K1) // S1 + 1, (ow0 - K1) // S1 + 1
    assert (oh1, ow1) == (K2, K2) and C == CIN, (oh1, ow1, C)
    xh = jnp.transpose(x, (0, 2, 3, 1))                       # NHWC
    cols = [xh[:, i:i + S0 * oh0:S0, j:j + S0 * ow0:S0, :]
            for i in range(K0) for j in range(K0)]
    p0 = jnp.stack(cols, axis=3).reshape(B, oh0, ow0, K0 * K0 * C)
    rows = []
    for t1 in range(K1 * K1):
        i1, j1 = divmod(t1, K1)
        for t2 in range(K2 * K2):
            i2, j2 = divmod(t2, K2)
            rows.append(p0[:, S1 * i2 + i1, S1 * j2 + j1, :])  # [B, 64]
    return jnp.concatenate(rows, axis=0)                       # [K1*K1*K2*K2*B, 64]


def _full_block(a):
    nd = a.ndim
    return pl.BlockSpec(a.shape, lambda nd=nd: (0,) * nd)


# ------------------------------------------------------------------------------
# Forward pass (mirrors BaseDiscriminator.forward) — a single pallas_call
# ------------------------------------------------------------------------------
def base_discriminator_forward(params, x, z):
    B = x.shape[0]
    p0g = _pregather_x(x).astype(MXU_DTYPE)           # [16*4*B, 64]
    zf = z.reshape(B, -1).astype(MXU_DTYPE)           # [B, 64]
    wslab = _pack_weight_slab(params)                 # [608, 32] bf16 (1 DMA)
    bslab = _pack_bias_slab(params)                   # [8, 32]   f32  (1 DMA)
    inputs = (p0g, zf, wslab, bslab)

    n1 = K2 * K2 * B
    flops = 2 * (p0g.shape[0] * (K0 * K0 * CIN) * C0      # x0
                 + n1 * (K1 * K1 * C0) * C1               # x1
                 + B * (K2 * K2 * C1) * C2                # x2
                 + B * LATENT * CZ + B * CZ * CZ          # z path
                 + B * C2 * CXZ + B * CZ * CXZ            # xz0 (split weight)
                 + B * CXZ)                               # final reduce
    bytes_accessed = sum(int(a.size) * a.dtype.itemsize for a in inputs) + B * 4
    cost = pl.CostEstimate(flops=int(flops), transcendentals=0,
                           bytes_accessed=int(bytes_accessed))

    out = pl.pallas_call(
        _fused_disc_kernel,
        out_shape=jax.ShapeDtypeStruct((B, 1), jnp.float32),
        in_specs=[_full_block(a) for a in inputs],
        out_specs=pl.BlockSpec((B, 1), lambda: (0, 0)),
        scratch_shapes=[pltpu.VMEM((n1, K1 * K1 * C0), jnp.float32),   # x1 im2col
                        pltpu.VMEM((B, K2 * K2 * C1), jnp.float32)],   # x2 im2col
        cost_estimate=cost,
    )(*inputs)
    return out                                          # [B, 1]


# ------------------------------------------------------------------------------
# Parameter init (deterministic, synthetic)
# ------------------------------------------------------------------------------
def _init_conv(key, oc, ic, kh, kw):
    kw_, kb_ = jax.random.split(key)
    fan_in = ic * kh * kw
    w = jax.random.normal(kw_, (oc, ic, kh, kw), jnp.float32) * (1.0 / jnp.sqrt(fan_in))
    b = jax.random.normal(kb_, (oc,), jnp.float32) * 0.01
    return w, b


def make_params(key, in_channels=CIN, latent_dim=LATENT):
    keys = jax.random.split(key, 7)
    return {
        "x0": _init_conv(keys[0], C0, in_channels, K0, K0),
        "x1": _init_conv(keys[1], C1, C0, K1, K1),
        "x2": _init_conv(keys[2], C2, C1, K2, K2),
        "z0": _init_conv(keys[3], CZ, latent_dim, 1, 1),
        "z1": _init_conv(keys[4], CZ, CZ, 1, 1),
        "xz0": _init_conv(keys[5], CXZ, C2 + CZ, 1, 1),
        "xz1": _init_conv(keys[6], 1, CXZ, 1, 1),
    }


# ------------------------------------------------------------------------------
# Pure-JAX reference (lax.conv) for correctness check
# ------------------------------------------------------------------------------
def _ref_conv(x, w, b, stride, slope=None):
    y = lax.conv_general_dilated(
        x, w, window_strides=(stride, stride), padding="VALID",
        dimension_numbers=("NCHW", "OIHW", "NCHW"))
    y = y + b.reshape(1, -1, 1, 1)
    if slope is not None:
        y = jnp.where(y >= 0.0, y, slope * y)
    return y


def reference_forward(params, x, z):
    h_x = _ref_conv(x, *params["x0"], stride=2, slope=LRELU_SLOPE)
    h_x = _ref_conv(h_x, *params["x1"], stride=2, slope=LRELU_SLOPE)
    h_x = _ref_conv(h_x, *params["x2"], stride=1, slope=LRELU_SLOPE)
    h_z = _ref_conv(z, *params["z0"], stride=1, slope=LRELU_SLOPE)
    h_z = _ref_conv(h_z, *params["z1"], stride=1, slope=LRELU_SLOPE)
    h_xz = jnp.concatenate([h_x, h_z], axis=1)
    out = _ref_conv(h_xz, *params["xz0"], stride=1, slope=LRELU_SLOPE)
    out = _ref_conv(out, *params["xz1"], stride=1, slope=None)
    return out.reshape(-1, 1)


if __name__ == "__main__":
    key = jax.random.PRNGKey(0)
    k_param, k_x, k_z = jax.random.split(key, 3)

    B, C, H, W = 2, 4, 16, 16

    params = make_params(k_param, in_channels=C, latent_dim=LATENT)
    x = jax.random.normal(k_x, (B, C, H, W), jnp.float32)
    z = jax.random.normal(k_z, (B, LATENT, 1, 1), jnp.float32)

    fwd = jax.jit(base_discriminator_forward)
    out = fwd(params, x, z)
    jax.block_until_ready(out)

    ref = reference_forward(params, x, z)
    assert out.shape == (B, 1), out.shape
    # bf16 MXU operands with f32 accumulation -> tolerance loosened per review.
    assert jnp.allclose(out, ref, atol=2e-2, rtol=2e-2), (
        float(jnp.max(jnp.abs(out - ref))), out, ref)

    print("KERNEL_OK")
</pallas_src>

<mosaic_0001>
module attributes {stable_mosaic.version = 11 : i64} {
  func.func @_fused_disc_kernel(%arg0: memref<128x64xbf16, #tpu.memory_space<vmem>>, %arg1: memref<2x64xbf16, #tpu.memory_space<vmem>>, %arg2: memref<608x32xbf16, #tpu.memory_space<vmem>>, %arg3: memref<8x32xf32, #tpu.memory_space<vmem>>, %arg4: memref<2x1xf32, #tpu.memory_space<vmem>>, %arg5: memref<8x256xf32, #tpu.memory_space<vmem>>, %arg6: memref<2x128xf32, #tpu.memory_space<vmem>>) attributes {dimension_semantics = [], scalar_prefetch = 0 : i64, scratch_operands = 2 : i64, tpu.core_type = #tpu.core_type<tc>} {
    %c0 = arith.constant 0 : index
    %c0_0 = arith.constant 0 : index
    %0 = vector.load %arg0[%c0, %c0_0] : memref<128x64xbf16, #tpu.memory_space<vmem>>, vector<128x64xbf16>
    %c0_1 = arith.constant 0 : index
    %c0_2 = arith.constant 0 : index
    %1 = vector.load %arg2[%c0_1, %c0_2] : memref<608x32xbf16, #tpu.memory_space<vmem>>, vector<64x16xbf16>
    %cst = arith.constant dense<0.000000e+00> : vector<128x16xf32>
    %2 = tpu.matmul %0, %1, %cst {dimension_numbers = #tpu.dot_dimension_numbers<[1], [0], [0], [1], [0, 0, 1, 1], [], []>} : vector<128x64xbf16>, vector<64x16xbf16>, vector<128x16xf32> -> vector<128x16xf32>
    %c0_3 = arith.constant 0 : index
    %c0_4 = arith.constant 0 : index
    %3 = vector.load %arg3[%c0_3, %c0_4] : memref<8x32xf32, #tpu.memory_space<vmem>>, vector<1x16xf32>
    %4 = vector.broadcast %3 : vector<1x16xf32> to vector<128x16xf32>
    %5 = arith.addf %2, %4 : vector<128x16xf32>
    %cst_5 = arith.constant 0.000000e+00 : f32
    %6 = vector.broadcast %cst_5 : f32 to vector<128x16xf32>
    %7 = arith.cmpf oge, %5, %6 : vector<128x16xf32>
    %cst_6 = arith.constant 2.000000e-01 : f32
    %8 = vector.broadcast %cst_6 : f32 to vector<128x16xf32>
    %9 = arith.mulf %8, %5 : vector<128x16xf32>
    %10 = arith.select %7, %5, %9 : vector<128x16xi1>, vector<128x16xf32>
    %11 = vector.extract_strided_slice %10 {offsets = [0, 0], sizes = [8, 16], strides = [1, 1]} : vector<128x16xf32> to vector<8x16xf32>
    %c0_7 = arith.constant 0 : index
    %c0_8 = arith.constant 0 : index
    %12 = vector.load %arg5[%c0_7, %c0_8] : memref<8x256xf32, #tpu.memory_space<vmem>>, vector<8x16xf32>
    tpu.vector_store %arg5[%c0_7, %c0_8], %11 {strides = array<i32>} : memref<8x256xf32, #tpu.memory_space<vmem>>, vector<8x16xf32>,
    %13 = vector.extract_strided_slice %10 {offsets = [8, 0], sizes = [8, 16], strides = [1, 1]} : vector<128x16xf32> to vector<8x16xf32>
    %c0_9 = arith.constant 0 : index
    %c16 = arith.constant 16 : index
    %14 = vector.load %arg5[%c0_9, %c16] : memref<8x256xf32, #tpu.memory_space<vmem>>, vector<8x16xf32>
    tpu.vector_store %arg5[%c0_9, %c16], %13 {strides = array<i32>} : memref<8x256xf32, #tpu.memory_space<vmem>>, vector<8x16xf32>,
    %15 = vector.extract_strided_slice %10 {offsets = [16, 0], sizes = [8, 16], strides = [1, 1]} : vector<128x16xf32> to vector<8x16xf32>
    %c0_10 = arith.constant 0 : index
    %c32 = arith.constant 32 : index
    %16 = vector.load %arg5[%c0_10, %c32] : memref<8x256xf32, #tpu.memory_space<vmem>>, vector<8x16xf32>
    tpu.vector_store %arg5[%c0_10, %c32], %15 {strides = array<i32>} : memref<8x256xf32, #tpu.memory_space<vmem>>, vector<8x16xf32>,
    %17 = vector.extract_strided_slice %10 {offsets = [24, 0], sizes = [8, 16], strides = [1, 1]} : vector<128x16xf32> to vector<8x16xf32>
    %c0_11 = arith.constant 0 : index
    %c48 = arith.constant 48 : index
    %18 = vector.load %arg5[%c0_11, %c48] : memref<8x256xf32, #tpu.memory_space<vmem>>, vector<8x16xf32>
    tpu.vector_store %arg5[%c0_11, %c48], %17 {strides = array<i32>} : memref<8x256xf32, #tpu.memory_space<vmem>>, vector<8x16xf32>,
    %19 = vector.extract_strided_slice %10 {offsets = [32, 0], sizes = [8, 16], strides = [1, 1]} : vector<128x16xf32> to vector<8x16xf32>
    %c0_12 = arith.constant 0 : index
    %c64 = arith.constant 64 : index
    %20 = vector.load %arg5[%c0_12, %c64] : memref<8x256xf32, #tpu.memory_space<vmem>>, vector<8x16xf32>
    tpu.vector_store %arg5[%c0_12, %c64], %19 {strides = array<i32>} : memref<8x256xf32, #tpu.memory_space<vmem>>, vector<8x16xf32>,
    %21 = vector.extract_strided_slice %10 {offsets = [40, 0], sizes = [8, 16], strides = [1, 1]} : vector<128x16xf32> to vector<8x16xf32>
    %c0_13 = arith.constant 0 : index
    %c80 = arith.constant 80 : index
    %22 = vector.load %arg5[%c0_13, %c80] : memref<8x256xf32, #tpu.memory_space<vmem>>, vector<8x16xf32>
    tpu.vector_store %arg5[%c0_13, %c80], %21 {strides = array<i32>} : memref<8x256xf32, #tpu.memory_space<vmem>>, vector<8x16xf32>,
    %23 = vector.extract_strided_slice %10 {offsets = [48, 0], sizes = [8, 16], strides = [1, 1]} : vector<128x16xf32> to vector<8x16xf32>
    %c0_14 = arith.constant 0 : index
    %c96 = arith.constant 96 : index
    %24 = vector.load %arg5[%c0_14, %c96] : memref<8x256xf32, #tpu.memory_space<vmem>>, vector<8x16xf32>
    tpu.vector_store %arg5[%c0_14, %c96], %23 {strides = array<i32>} : memref<8x256xf32, #tpu.memory_space<vmem>>, vector<8x16xf32>,
    %25 = vector.extract_strided_slice %10 {offsets = [56, 0], sizes = [8, 16], strides = [1, 1]} : vector<128x16xf32> to vector<8x16xf32>
    %c0_15 = arith.constant 0 : index
    %c112 = arith.constant 112 : index
    %26 = vector.load %arg5[%c0_15, %c112] : memref<8x256xf32, #tpu.memory_space<vmem>>, vector<8x16xf32>
    tpu.vector_store %arg5[%c0_15, %c112], %25 {strides = array<i32>} : memref<8x256xf32, #tpu.memory_space<vmem>>, vector<8x16xf32>,
    %27 = vector.extract_strided_slice %10 {offsets = [64, 0], sizes = [8, 16], strides = [1, 1]} : vector<128x16xf32> to vector<8x16xf32>
    %c0_16 = arith.constant 0 : index
    %c128 = arith.constant 128 : index
    %28 = vector.load %arg5[%c0_16, %c128] : memref<8x256xf32, #tpu.memory_space<vmem>>, vector<8x16xf32>
    tpu.vector_store %arg5[%c0_16, %c128], %27 {strides = array<i32>} : memref<8x256xf32, #tpu.memory_space<vmem>>, vector<8x16xf32>,
    %29 = vector.extract_strided_slice %10 {offsets = [72, 0], sizes = [8, 16], strides = [1, 1]} : vector<128x16xf32> to vector<8x16xf32>
    %c0_17 = arith.constant 0 : index
    %c144 = arith.constant 144 : index
    %30 = vector.load %arg5[%c0_17, %c144] : memref<8x256xf32, #tpu.memory_space<vmem>>, vector<8x16xf32>
    tpu.vector_store %arg5[%c0_17, %c144], %29 {strides = array<i32>} : memref<8x256xf32, #tpu.memory_space<vmem>>, vector<8x16xf32>,
    %31 = vector.extract_strided_slice %10 {offsets = [80, 0], sizes = [8, 16], strides = [1, 1]} : vector<128x16xf32> to vector<8x16xf32>
    %c0_18 = arith.constant 0 : index
    %c160 = arith.constant 160 : index
    %32 = vector.load %arg5[%c0_18, %c160] : memref<8x256xf32, #tpu.memory_space<vmem>>, vector<8x16xf32>
    tpu.vector_store %arg5[%c0_18, %c160], %31 {strides = array<i32>} : memref<8x256xf32, #tpu.memory_space<vmem>>, vector<8x16xf32>,
    %33 = vector.extract_strided_slice %10 {offsets = [88, 0], sizes = [8, 16], strides = [1, 1]} : vector<128x16xf32> to vector<8x16xf32>
    %c0_19 = arith.constant 0 : index
    %c176 = arith.constant 176 : index
    %34 = vector.load %arg5[%c0_19, %c176] : memref<8x256xf32, #tpu.memory_space<vmem>>, vector<8x16xf32>
    tpu.vector_store %arg5[%c0_19, %c176], %33 {strides = array<i32>} : memref<8x256xf32, #tpu.memory_space<vmem>>, vector<8x16xf32>,
    %35 = vector.extract_strided_slice %10 {offsets = [96, 0], sizes = [8, 16], strides = [1, 1]} : vector<128x16xf32> to vector<8x16xf32>
    %c0_20 = arith.constant 0 : index
    %c192 = arith.constant 192 : index
    %36 = vector.load %arg5[%c0_20, %c192] : memref<8x256xf32, #tpu.memory_space<vmem>>, vector<8x16xf32>
    tpu.vector_store %arg5[%c0_20, %c192], %35 {strides = array<i32>} : memref<8x256xf32, #tpu.memory_space<vmem>>, vector<8x16xf32>,
    %37 = vector.extract_strided_slice %10 {offsets = [104, 0], sizes = [8, 16], strides = [1, 1]} : vector<128x16xf32> to vector<8x16xf32>
    %c0_21 = arith.constant 0 : index
    %c208 = arith.constant 208 : index
    %38 = vector.load %arg5[%c0_21, %c208] : memref<8x256xf32, #tpu.memory_space<vmem>>, vector<8x16xf32>
    tpu.vector_store %arg5[%c0_21, %c208], %37 {strides = array<i32>} : memref<8x256xf32, #tpu.memory_space<vmem>>, vector<8x16xf32>,
    %39 = vector.extract_strided_slice %10 {offsets = [112, 0], sizes = [8, 16], strides = [1, 1]} : vector<128x16xf32> to vector<8x16xf32>
    %c0_22 = arith.constant 0 : index
    %c224 = arith.constant 224 : index
    %40 = vector.load %arg5[%c0_22, %c224] : memref<8x256xf32, #tpu.memory_space<vmem>>, vector<8x16xf32>
    tpu.vector_store %arg5[%c0_22, %c224], %39 {strides = array<i32>} : memref<8x256xf32, #tpu.memory_space<vmem>>, vector<8x16xf32>,
    %41 = vector.extract_strided_slice %10 {offsets = [120, 0], sizes = [8, 16], strides = [1, 1]} : vector<128x16xf32> to vector<8x16xf32>
    %c0_23 = arith.constant 0 : index
    %c240 = arith.constant 240 : index
    %42 = vector.load %arg5[%c0_23, %c240] : memref<8x256xf32, #tpu.memory_space<vmem>>, vector<8x16xf32>
    tpu.vector_store %arg5[%c0_23, %c240], %41 {strides = array<i32>} : memref<8x256xf32, #tpu.memory_space<vmem>>, vector<8x16xf32>,
    %c64_24 = arith.constant 64 : index
    %c0_25 = arith.constant 0 : index
    %43 = vector.load %arg2[%c64_24, %c0_25] : memref<608x32xbf16, #tpu.memory_space<vmem>>, vector<256x32xbf16>
    %c0_26 = arith.constant 0 : index
    %c0_27 = arith.constant 0 : index
    %44 = vector.load %arg5[%c0_26, %c0_27] : memref<8x256xf32, #tpu.memory_space<vmem>>, vector<8x256xf32>
    %45 = arith.truncf %44 : vector<8x256xf32> to vector<8x256xbf16>
    %cst_28 = arith.constant dense<0.000000e+00> : vector<8x32xf32>
    %46 = tpu.matmul %45, %43, %cst_28 {dimension_numbers = #tpu.dot_dimension_numbers<[1], [0], [0], [1], [0, 0, 1, 1], [], []>} : vector<8x256xbf16>, vector<256x32xbf16>, vector<8x32xf32> -> vector<8x32xf32>
    %c1 = arith.constant 1 : index
    %c0_29 = arith.constant 0 : index
    %47 = vector.load %arg3[%c1, %c0_29] : memref<8x32xf32, #tpu.memory_space<vmem>>, vector<1x32xf32>
    %48 = vector.broadcast %47 : vector<1x32xf32> to vector<8x32xf32>
    %49 = arith.addf %46, %48 : vector<8x32xf32>
    %cst_30 = arith.constant 0.000000e+00 : f32
    %50 = vector.broadcast %cst_30 : f32 to vector<8x32xf32>
    %51 = arith.cmpf oge, %49, %50 : vector<8x32xf32>
    %cst_31 = arith.constant 2.000000e-01 : f32
    %52 = vector.broadcast %cst_31 : f32 to vector<8x32xf32>
    %53 = arith.mulf %52, %49 : vector<8x32xf32>
    %54 = arith.select %51, %49, %53 : vector<8x32xi1>, vector<8x32xf32>
    %55 = vector.extract_strided_slice %54 {offsets = [0, 0], sizes = [2, 32], strides = [1, 1]} : vector<8x32xf32> to vector<2x32xf32>
    %c0_32 = arith.constant 0 : index
    %c0_33 = arith.constant 0 : index
    %56 = vector.load %arg6[%c0_32, %c0_33] : memref<2x128xf32, #tpu.memory_space<vmem>>, vector<2x32xf32>
    tpu.vector_store %arg6[%c0_32, %c0_33], %55 {strides = array<i32>} : memref<2x128xf32, #tpu.memory_space<vmem>>, vector<2x32xf32>,
    %57 = vector.extract_strided_slice %54 {offsets = [2, 0], sizes = [2, 32], strides = [1, 1]} : vector<8x32xf32> to vector<2x32xf32>
    %c0_34 = arith.constant 0 : index
    %c32_35 = arith.constant 32 : index
    %58 = vector.load %arg6[%c0_34, %c32_35] : memref<2x128xf32, #tpu.memory_space<vmem>>, vector<2x32xf32>
    tpu.vector_store %arg6[%c0_34, %c32_35], %57 {strides = array<i32>} : memref<2x128xf32, #tpu.memory_space<vmem>>, vector<2x32xf32>,
    %59 = vector.extract_strided_slice %54 {offsets = [4, 0], sizes = [2, 32], strides = [1, 1]} : vector<8x32xf32> to vector<2x32xf32>
    %c0_36 = arith.constant 0 : index
    %c64_37 = arith.constant 64 : index
    %60 = vector.load %arg6[%c0_36, %c64_37] : memref<2x128xf32, #tpu.memory_space<vmem>>, vector<2x32xf32>
    tpu.vector_store %arg6[%c0_36, %c64_37], %59 {strides = array<i32>} : memref<2x128xf32, #tpu.memory_space<vmem>>, vector<2x32xf32>,
    %61 = vector.extract_strided_slice %54 {offsets = [6, 0], sizes = [2, 32], strides = [1, 1]} : vector<8x32xf32> to vector<2x32xf32>
    %c0_38 = arith.constant 0 : index
    %c96_39 = arith.constant 96 : index
    %62 = vector.load %arg6[%c0_38, %c96_39] : memref<2x128xf32, #tpu.memory_space<vmem>>, vector<2x32xf32>
    tpu.vector_store %arg6[%c0_38, %c96_39], %61 {strides = array<i32>} : memref<2x128xf32, #tpu.memory_space<vmem>>, vector<2x32xf32>,
    %c320 = arith.constant 320 : index
    %c0_40 = arith.constant 0 : index
    %63 = vector.load %arg2[%c320, %c0_40] : memref<608x32xbf16, #tpu.memory_space<vmem>>, vector<128x32xbf16>
    %c0_41 = arith.constant 0 : index
    %c0_42 = arith.constant 0 : index
    %64 = vector.load %arg6[%c0_41, %c0_42] : memref<2x128xf32, #tpu.memory_space<vmem>>, vector<2x128xf32>
    %65 = arith.truncf %64 : vector<2x128xf32> to vector<2x128xbf16>
    %cst_43 = arith.constant dense<0.000000e+00> : vector<2x32xf32>
    %66 = tpu.matmul %65, %63, %cst_43 {dimension_numbers = #tpu.dot_dimension_numbers<[1], [0], [0], [1], [0, 0, 1, 1], [], []>} : vector<2x128xbf16>, vector<128x32xbf16>, vector<2x32xf32> -> vector<2x32xf32>
    %c2 = arith.constant 2 : index
    %c0_44 = arith.constant 0 : index
    %67 = vector.load %arg3[%c2, %c0_44] : memref<8x32xf32, #tpu.memory_space<vmem>>, vector<1x32xf32>
    %68 = vector.broadcast %67 : vector<1x32xf32> to vector<2x32xf32>
    %69 = arith.addf %66, %68 : vector<2x32xf32>
    %cst_45 = arith.constant 0.000000e+00 : f32
    %70 = vector.broadcast %cst_45 : f32 to vector<2x32xf32>
    %71 = arith.cmpf oge, %69, %70 : vector<2x32xf32>
    %cst_46 = arith.constant 2.000000e-01 : f32
    %72 = vector.broadcast %cst_46 : f32 to vector<2x32xf32>
    %73 = arith.mulf %72, %69 : vector<2x32xf32>
    %74 = arith.select %71, %69, %73 : vector<2x32xi1>, vector<2x32xf32>
    %c448 = arith.constant 448 : index
    %c0_47 = arith.constant 0 : index
    %75 = vector.load %arg2[%c448, %c0_47] : memref<608x32xbf16, #tpu.memory_space<vmem>>, vector<64x32xbf16>
    %c512 = arith.constant 512 : index
    %c0_48 = arith.constant 0 : index
    %76 = vector.load %arg2[%c512, %c0_48] : memref<608x32xbf16, #tpu.memory_space<vmem>>, vector<32x32xbf16>
    %c0_49 = arith.constant 0 : index
    %c0_50 = arith.constant 0 : index
    %77 = vector.load %arg1[%c0_49, %c0_50] : memref<2x64xbf16, #tpu.memory_space<vmem>>, vector<2x64xbf16>
    %cst_51 = arith.constant dense<0.000000e+00> : vector<2x32xf32>
    %78 = tpu.matmul %77, %75, %cst_51 {dimension_numbers = #tpu.dot_dimension_numbers<[1], [0], [0], [1], [0, 0, 1, 1], [], []>} : vector<2x64xbf16>, vector<64x32xbf16>, vector<2x32xf32> -> vector<2x32xf32>
    %c3 = arith.constant 3 : index
    %c0_52 = arith.constant 0 : index
    %79 = vector.load %arg3[%c3, %c0_52] : memref<8x32xf32, #tpu.memory_space<vmem>>, vector<1x32xf32>
    %80 = vector.broadcast %79 : vector<1x32xf32> to vector<2x32xf32>
    %81 = arith.addf %78, %80 : vector<2x32xf32>
    %cst_53 = arith.constant 0.000000e+00 : f32
    %82 = vector.broadcast %cst_53 : f32 to vector<2x32xf32>
    %83 = arith.cmpf oge, %81, %82 : vector<2x32xf32>
    %cst_54 = arith.constant 2.000000e-01 : f32
    %84 = vector.broadcast %cst_54 : f32 to vector<2x32xf32>
    %85 = arith.mulf %84, %81 : vector<2x32xf32>
    %86 = arith.select %83, %81, %85 : vector<2x32xi1>, vector<2x32xf32>
    %87 = arith.truncf %86 : vector<2x32xf32> to vector<2x32xbf16>
    %cst_55 = arith.constant dense<0.000000e+00> : vector<2x32xf32>
    %88 = tpu.matmul %87, %76, %cst_55 {dimension_numbers = #tpu.dot_dimension_numbers<[1], [0], [0], [1], [0, 0, 1, 1], [], []>} : vector<2x32xbf16>, vector<32x32xbf16>, vector<2x32xf32> -> vector<2x32xf32>
    %c4 = arith.constant 4 : index
    %c0_56 = arith.constant 0 : index
    %89 = vector.load %arg3[%c4, %c0_56] : memref<8x32xf32, #tpu.memory_space<vmem>>, vector<1x32xf32>
    %90 = vector.broadcast %89 : vector<1x32xf32> to vector<2x32xf32>
    %91 = arith.addf %88, %90 : vector<2x32xf32>
    %cst_57 = arith.constant 0.000000e+00 : f32
    %92 = vector.broadcast %cst_57 : f32 to vector<2x32xf32>
    %93 = arith.cmpf oge, %91, %92 : vector<2x32xf32>
    %cst_58 = arith.constant 2.000000e-01 : f32
    %94 = vector.broadcast %cst_58 : f32 to vector<2x32xf32>
    %95 = arith.mulf %94, %91 : vector<2x32xf32>
    %96 = arith.select %93, %91, %95 : vector<2x32xi1>, vector<2x32xf32>
    %c544 = arith.constant 544 : index
    %c0_59 = arith.constant 0 : index
    %97 = vector.load %arg2[%c544, %c0_59] : memref<608x32xbf16, #tpu.memory_space<vmem>>, vector<32x32xbf16>
    %c576 = arith.constant 576 : index
    %c0_60 = arith.constant 0 : index
    %98 = vector.load %arg2[%c576, %c0_60] : memref<608x32xbf16, #tpu.memory_space<vmem>>, vector<32x32xbf16>
    %99 = arith.truncf %74 : vector<2x32xf32> to vector<2x32xbf16>
    %cst_61 = arith.constant dense<0.000000e+00> : vector<2x32xf32>
    %100 = tpu.matmul %99, %97, %cst_61 {dimension_numbers = #tpu.dot_dimension_numbers<[1], [0], [0], [1], [0, 0, 1, 1], [], []>} : vector<2x32xbf16>, vector<32x32xbf16>, vector<2x32xf32> -> vector<2x32xf32>
    %101 = arith.truncf %96 : vector<2x32xf32> to vector<2x32xbf16>
    %cst_62 = arith.constant dense<0.000000e+00> : vector<2x32xf32>
    %102 = tpu.matmul %101, %98, %cst_62 {dimension_numbers = #tpu.dot_dimension_numbers<[1], [0], [0], [1], [0, 0, 1, 1], [], []>} : vector<2x32xbf16>, vector<32x32xbf16>, vector<2x32xf32> -> vector<2x32xf32>
    %103 = arith.addf %100, %102 : vector<2x32xf32>
    %c5 = arith.constant 5 : index
    %c0_63 = arith.constant 0 : index
    %104 = vector.load %arg3[%c5, %c0_63] : memref<8x32xf32, #tpu.memory_space<vmem>>, vector<1x32xf32>
    %105 = vector.broadcast %104 : vector<1x32xf32> to vector<2x32xf32>
    %106 = arith.addf %103, %105 : vector<2x32xf32>
    %cst_64 = arith.constant 0.000000e+00 : f32
    %107 = vector.broadcast %cst_64 : f32 to vector<2x32xf32>
    %108 = arith.cmpf oge, %106, %107 : vector<2x32xf32>
    %cst_65 = arith.constant 2.000000e-01 : f32
    %109 = vector.broadcast %cst_65 : f32 to vector<2x32xf32>
    %110 = arith.mulf %109, %106 : vector<2x32xf32>
    %111 = arith.select %108, %106, %110 : vector<2x32xi1>, vector<2x32xf32>
    %c6 = arith.constant 6 : index
    %c0_66 = arith.constant 0 : index
    %112 = vector.load %arg3[%c6, %c0_66] : memref<8x32xf32, #tpu.memory_space<vmem>>, vector<1x32xf32>
    %113 = vector.broadcast %112 : vector<1x32xf32> to vector<2x32xf32>
    %114 = arith.mulf %111, %113 : vector<2x32xf32>
    %cst_67 = arith.constant dense<0.000000e+00> : vector<2xf32>
    %115 = vector.multi_reduction <add>, %114, %cst_67 [1] : vector<2x32xf32> to vector<2xf32>
    %116 = vector.shape_cast %115 : vector<2xf32> to vector<2x1xf32>
    %c7 = arith.constant 7 : index
    %c0_68 = arith.constant 0 : index
    %117 = vector.load %arg3[%c7, %c0_68] : memref<8x32xf32, #tpu.memory_space<vmem>>, vector<1x1xf32>
    %118 = vector.broadcast %117 : vector<1x1xf32> to vector<2x1xf32>
    %119 = arith.addf %116, %118 : vector<2x1xf32>
    %c0_69 = arith.constant 0 : index
    %c0_70 = arith.constant 0 : index
    %120 = vector.load %arg4[%c0_69, %c0_70] : memref<2x1xf32, #tpu.memory_space<vmem>>, vector<2x1xf32>
    tpu.vector_store %arg4[%c0_69, %c0_70], %119 {strides = array<i32>} : memref<2x1xf32, #tpu.memory_space<vmem>>, vector<2x1xf32>,
    return
  }
}

</mosaic_0001>

<llo_original>
// kernel: base_discriminator_forward.1
$region0: #{base_discriminator_forward.1}
  #allocation0 [shape = 'u32[]', space=smem, size = 0x4, offset = 0x4, fixed_abs, tag = 'smem constant byte address 0x4 - core index']
  #allocation1 [shape = 'u32[144,128]{1,0:T(1,128)}', space=vmem, size = 0x12000, scoped, tag = 'internal scratch']
  #allocation2 [shape = 'f32[8,256]{1,0:T(8,128)}', space=vmem, size = 0x2000, scoped, tag = 'scratch operand']
  #allocation3 [shape = 'f32[2,128]{1,0:T(2,128)}', space=vmem, size = 0x400, scoped, tag = 'scratch operand']
  %s0 = inlined_call_operand.vmem [shape: bf16[128,64], index: 0, kind: input, shape index: {}]
  %s1 = inlined_call_operand.vmem [shape: bf16[2,64], index: 1, kind: input, shape index: {}]
  %s2 = inlined_call_operand.vmem [shape: bf16[608,32], index: 2, kind: input, shape index: {}]
  %s3 = inlined_call_operand.vmem [shape: f32[8,32], index: 3, kind: input, shape index: {}]
  %s4 = inlined_call_operand.vmem [shape: f32[2,1], index: 4, kind: output, shape index: {}]
  %s5 = sld [smem:[#allocation0]]
  $region26: #{base_discriminator_forward.1} parent=0
    _
  %s7 = ssub.s32 1, %s5
  %s8 = scalar_select 0, %s7, %s5
  // Predicated region
  $region2: #{base_discriminator_forward.1} parent=0 // pred_check
    _
  $region3: #{base_discriminator_forward.1} parent=0 // pred_check_branch
    %10 = sbr.rel (0) target = $region5
  $region4: #{base_discriminator_forward.1} parent=0 // pred_region
    _
  $region5: #{base_discriminator_forward.1} parent=0 // pred_fallthru
    _
  // Predicated region
  $region6: #{base_discriminator_forward.1} parent=0 // pred_check
    _
  $region7: #{base_discriminator_forward.1} parent=0 // pred_check_branch
    %12 = sbr.rel (0) target = $region9
  $region8: #{base_discriminator_forward.1} parent=0 // pred_region
    _
  $region9: #{base_discriminator_forward.1} parent=0 // pred_fallthru
    _
  // Predicated region
  $region10: #{base_discriminator_forward.1} parent=0 // pred_check
    _
  $region11: #{base_discriminator_forward.1} parent=0 // pred_check_branch
    %14 = sbr.rel (0) target = $region13
  $region12: #{base_discriminator_forward.1} parent=0 // pred_region
    _
  $region13: #{base_discriminator_forward.1} parent=0 // pred_fallthru
    _
  // Predicated region
  $region14: #{base_discriminator_forward.1} parent=0 // pred_check
    _
  $region15: #{base_discriminator_forward.1} parent=0 // pred_check_branch
    %16 = sbr.rel (0) target = $region17
  $region16: #{base_discriminator_forward.1} parent=0 // pred_region
    _
  $region17: #{base_discriminator_forward.1} parent=0 // pred_fallthru
    _
  %v18 = vld [vmem:[%s0] sm:$0xf]
  %v19 = vld [vmem:[%s0 + $0x4] sm:$0xf]
  %v20 = vld [vmem:[%s0 + $0x8] sm:$0xf]
  %v21 = vld [vmem:[%s0 + $0xc] sm:$0xf]
  %v22 = vld [vmem:[%s0 + $0x10] sm:$0xf]
  %v23 = vld [vmem:[%s0 + $0x14] sm:$0xf]
  %v24 = vld [vmem:[%s0 + $0x18] sm:$0xf]
  %v25 = vld [vmem:[%s0 + $0x1c] sm:$0xf]
  %v26 = vld [vmem:[%s0 + $0x20] sm:$0xf]
  %v27 = vld [vmem:[%s0 + $0x24] sm:$0xf]
  %v28 = vld [vmem:[%s0 + $0x28] sm:$0xf]
  %v29 = vld [vmem:[%s0 + $0x2c] sm:$0xf]
  %v30 = vld [vmem:[%s0 + $0x30] sm:$0xf]
  %v31 = vld [vmem:[%s0 + $0x34] sm:$0xf]
  %v32 = vld [vmem:[%s0 + $0x38] sm:$0xf]
  %v33 = vld [vmem:[%s0 + $0x3c] sm:$0xf]
  %v34 = vld [vmem:[%s2] sm:$0xf]
  %v35 = vld [vmem:[%s2 + $0x4] sm:$0xf]
  %v36 = vld [vmem:[%s2 + $0x8] sm:$0xf]
  %v37 = vld [vmem:[%s2 + $0xc] sm:$0xf]
  %v38 = vld [vmem:[%s2 + $0x10] sm:$0xf]
  %v39 = vld [vmem:[%s2 + $0x14] sm:$0xf]
  %v40 = vld [vmem:[%s2 + $0x18] sm:$0xf]
  %v41 = vld [vmem:[%s2 + $0x1c] sm:$0xf]
  %v42 = vld [vmem:[%s3] sm:$0x1]
  %v43 = vlaneseq
  %v44 = vshrl.u32 %v43, 7
  %v45 = vsub.s32 0, %v44
  %v46 = vrot.slane %v42, %v45
  %v63 = vunpack.c.l.b16 %v18
  %v64 = vunpack.c.l.b16 %v19
  %v65 = vunpack.c.l.b16 %v20
  %v66 = vunpack.c.l.b16 %v21
  %v67 = vunpack.c.l.b16 %v22
  %v68 = vunpack.c.l.b16 %v23
  %v69 = vunpack.c.l.b16 %v24
  %v70 = vunpack.c.l.b16 %v25
  %v71 = vunpack.c.l.b16 %v26
  %v72 = vunpack.c.l.b16 %v27
  %v73 = vunpack.c.l.b16 %v28
  %v74 = vunpack.c.l.b16 %v29
  %v75 = vunpack.c.l.b16 %v30
  %v76 = vunpack.c.l.b16 %v31
  %v77 = vunpack.c.l.b16 %v32
  %v78 = vunpack.c.l.b16 %v33
  %v79 = vpack.c.b16 %v64, %v63
  %v80 = vpack.c.b16 %v66, %v65
  %v81 = vpack.c.b16 %v68, %v67
  %v82 = vpack.c.b16 %v70, %v69
  %v83 = vpack.c.b16 %v72, %v71
  %v84 = vpack.c.b16 %v74, %v73
  %v85 = vpack.c.b16 %v76, %v75
  %v86 = vpack.c.b16 %v78, %v77
  %v95 = vunpack.c.l.b16 %v34
  %v96 = vunpack.c.l.b16 %v35
  %v97 = vunpack.c.l.b16 %v36
  %v98 = vunpack.c.l.b16 %v37
  %v99 = vunpack.c.l.b16 %v38
  %v100 = vunpack.c.l.b16 %v39
  %v101 = vunpack.c.l.b16 %v40
  %v102 = vunpack.c.l.b16 %v41
  %v103 = vpack.c.b16 %v96, %v95
  %v104 = vpack.c.b16 %v98, %v97
  %v105 = vpack.c.b16 %v100, %v99
  %v106 = vpack.c.b16 %v102, %v101
  %vm111 = vcmask 523264
  %v113 = vsel %vm111, %v79, 0
  %v116 = vsel %vm111, %v80, 0
  %v119 = vsel %vm111, %v81, 0
  %v122 = vsel %vm111, %v82, 0
  %v125 = vsel %vm111, %v83, 0
  %v128 = vsel %vm111, %v84, 0
  %v131 = vsel %vm111, %v85, 0
  %v134 = vsel %vm111, %v86, 0
  %136 = vmatprep.subr.bf16.mxu0 0
  %137 = vmatpush1.bf16.msra.mxu0 %v103
  %138 = vmatprep.subr.bf16.mxu0 0
  %139 = vmatpush1.bf16.msra.mxu0 %v104
  %140 = vmatprep.subr.bf16.mxu0 0
  %141 = vmatpush1.bf16.msra.mxu0 %v105
  %142 = vmatprep.subr.bf16.mxu0 0
  %143 = vmatpush1.bf16.msra.mxu0 %v106
  %144 = vmatprep.subr.bf16.mxu0 0
  %145 = vmatpush1.bf16.msra.mxu0 0
  %146 = vmatprep.subr.bf16.mxu0 0
  %147 = vmatpush1.bf16.msra.mxu0 0
  %148 = vmatprep.subr.bf16.mxu0 0
  %149 = vmatpush1.bf16.msra.mxu0 0
  %150 = vmatprep.subr.bf16.mxu0 0
  %151 = vmatpush1.bf16.msra.mxu0 0
  %152 = vmatprep.subr.bf16.mxu0 0
  %153 = vmatpush1.bf16.msra.mxu0 0
  %154 = vmatprep.subr.bf16.mxu0 0
  %155 = vmatpush1.bf16.msra.mxu0 0
  %156 = vmatprep.subr.bf16.mxu0 0
  %157 = vmatpush1.bf16.msra.mxu0 0
  %158 = vmatprep.subr.bf16.mxu0 0
  %159 = vmatpush1.bf16.msra.mxu0 0
  %160 = vmatprep.subr.bf16.mxu0 0
  %161 = vmatpush1.bf16.msra.mxu0 0
  %162 = vmatprep.subr.bf16.mxu0 0
  %163 = vmatpush1.bf16.msra.mxu0 0
  %164 = vmatprep.subr.bf16.mxu0 0
  %165 = vmatpush1.bf16.msra.mxu0 0
  %166 = vmatprep.subr.bf16.mxu0 0
  %167 = vmatpush1.bf16.msra.mxu0 0
  %168 = vmatprep.mubr.bf16.mxu0 0
  %169 = vmatmul.mubr.bf16.gmra.mrb[0].mxu0 %v113
  %v170 = vpop.f32.mrb[0].mxu0
  %v171 = vadd.f32 %v46, %v170
  %v172 = vpop.f32.mrb[0].mxu0
  %v173 = vpop.f32.mrb[0].mxu0
  %v174 = vadd.f32 %v46, %v173
  %v175 = vpop.f32.mrb[0].mxu0
  %176 = vmatprep.mubr.bf16.mxu0 0
  %177 = vmatmul.mubr.bf16.gmra.mrb[0].mxu0 %v116
  %v178 = vpop.f32.mrb[0].mxu0
  %v179 = vadd.f32 %v46, %v178
  %v180 = vpop.f32.mrb[0].mxu0
  %v181 = vpop.f32.mrb[0].mxu0
  %v182 = vadd.f32 %v46, %v181
  %v183 = vpop.f32.mrb[0].mxu0
  %184 = vmatprep.mubr.bf16.mxu0 0
  %185 = vmatmul.mubr.bf16.gmra.mrb[0].mxu0 %v119
  %v186 = vpop.f32.mrb[0].mxu0
  %v187 = vadd.f32 %v46, %v186
  %v188 = vpop.f32.mrb[0].mxu0
  %v189 = vpop.f32.mrb[0].mxu0
  %v190 = vadd.f32 %v46, %v189
  %v191 = vpop.f32.mrb[0].mxu0
  %192 = vmatprep.mubr.bf16.mxu0 0
  %193 = vmatmul.mubr.bf16.gmra.mrb[0].mxu0 %v122
  %v194 = vpop.f32.mrb[0].mxu0
  %v195 = vadd.f32 %v46, %v194
  %v196 = vpop.f32.mrb[0].mxu0
  %v197 = vpop.f32.mrb[0].mxu0
  %v198 = vadd.f32 %v46, %v197
  %v199 = vpop.f32.mrb[0].mxu0
  %200 = vmatprep.mubr.bf16.mxu0 0
  %201 = vmatmul.mubr.bf16.gmra.mrb[0].mxu0 %v125
  %v202 = vpop.f32.mrb[0].mxu0
  %v203 = vadd.f32 %v46, %v202
  %v204 = vpop.f32.mrb[0].mxu0
  %v205 = vpop.f32.mrb[0].mxu0
  %v206 = vadd.f32 %v46, %v205
  %v207 = vpop.f32.mrb[0].mxu0
  %208 = vmatprep.mubr.bf16.mxu0 0
  %209 = vmatmul.mubr.bf16.gmra.mrb[0].mxu0 %v128
  %v210 = vpop.f32.mrb[0].mxu0
  %v211 = vadd.f32 %v46, %v210
  %v212 = vpop.f32.mrb[0].mxu0
  %v213 = vpop.f32.mrb[0].mxu0
  %v214 = vadd.f32 %v46, %v213
  %v215 = vpop.f32.mrb[0].mxu0
  %216 = vmatprep.mubr.bf16.mxu0 0
  %217 = vmatmul.mubr.bf16.gmra.mrb[0].mxu0 %v131
  %v218 = vpop.f32.mrb[0].mxu0
  %v219 = vadd.f32 %v46, %v218
  %v220 = vpop.f32.mrb[0].mxu0
  %v221 = vpop.f32.mrb[0].mxu0
  %v222 = vadd.f32 %v46, %v221
  %v223 = vpop.f32.mrb[0].mxu0
  %224 = vmatprep.mubr.bf16.mxu0 0
  %225 = vmatmul.mubr.bf16.gmra.mrb[0].mxu0 %v134
  %v226 = vpop.f32.mrb[0].mxu0
  %v227 = vadd.f32 %v46, %v226
  %v228 = vpop.f32.mrb[0].mxu0
  %v229 = vpop.f32.mrb[0].mxu0
  %v230 = vadd.f32 %v46, %v229
  %v231 = vpop.f32.mrb[0].mxu0
  %232 = vdwg.mxu0
  %vm233 = vcmp.ge.f32.partialorder %v171, 0.0
  %vm234 = vcmp.ge.f32.partialorder %v174, 0.0
  %vm235 = vcmp.ge.f32.partialorder %v179, 0.0
  %vm236 = vcmp.ge.f32.partialorder %v182, 0.0
  %vm237 = vcmp.ge.f32.partialorder %v187, 0.0
  %vm238 = vcmp.ge.f32.partialorder %v190, 0.0
  %vm239 = vcmp.ge.f32.partialorder %v195, 0.0
  %vm240 = vcmp.ge.f32.partialorder %v198, 0.0
  %vm241 = vcmp.ge.f32.partialorder %v203, 0.0
  %vm242 = vcmp.ge.f32.partialorder %v206, 0.0
  %vm243 = vcmp.ge.f32.partialorder %v211, 0.0
  %vm244 = vcmp.ge.f32.partialorder %v214, 0.0
  %vm245 = vcmp.ge.f32.partialorder %v219, 0.0
  %vm246 = vcmp.ge.f32.partialorder %v222, 0.0
  %vm247 = vcmp.ge.f32.partialorder %v227, 0.0
  %vm248 = vcmp.ge.f32.partialorder %v230, 0.0
  %v249 = vmul.f32 %v171, 0.2
  %v250 = vmul.f32 %v174, 0.2
  %v251 = vmul.f32 %v179, 0.2
  %v252 = vmul.f32 %v182, 0.2
  %v253 = vmul.f32 %v187, 0.2
  %v254 = vmul.f32 %v190, 0.2
  %v255 = vmul.f32 %v195, 0.2
  %v256 = vmul.f32 %v198, 0.2
  %v257 = vmul.f32 %v203, 0.2
  %v258 = vmul.f32 %v206, 0.2
  %v259 = vmul.f32 %v211, 0.2
  %v260 = vmul.f32 %v214, 0.2
  %v261 = vmul.f32 %v219, 0.2
  %v262 = vmul.f32 %v222, 0.2
  %v263 = vmul.f32 %v227, 0.2
  %v264 = vmul.f32 %v230, 0.2
  %v265 = vsel %vm233, %v171, %v249
  %v266 = vsel %vm234, %v174, %v250
  %v267 = vsel %vm235, %v179, %v251
  %v268 = vsel %vm236, %v182, %v252
  %v269 = vsel %vm237, %v187, %v253
  %v270 = vsel %vm238, %v190, %v254
  %v271 = vsel %vm239, %v195, %v255
  %v272 = vsel %vm240, %v198, %v256
  %v273 = vsel %vm241, %v203, %v257
  %v274 = vsel %vm242, %v206, %v258
  %v275 = vsel %vm243, %v211, %v259
  %v276 = vsel %vm244, %v214, %v260
  %v277 = vsel %vm245, %v219, %v261
  %v278 = vsel %vm246, %v222, %v262
  %v279 = vsel %vm247, %v227, %v263
  %v280 = vsel %vm248, %v230, %v264
  %vm281 = vcmask 130048
  %282 = vst.msk [vmem:[#allocation2] sm:$0xff] %vm281, %v265
  %284 = vrot.lane.b32.xlu0 %v266, 16
  %v285 = vpop.permute.xlu0 %284
  %vm287 = vcmask 261248
  %288 = vst.msk [vmem:[#allocation2] sm:$0xff] %vm287, %v285
  %290 = vrot.lane.b32.xlu0 %v267, 32
  %v291 = vpop.permute.xlu0 %290
  %vm293 = vcmask 392448
  %294 = vst.msk [vmem:[#allocation2] sm:$0xff] %vm293, %v291
  %296 = vrot.lane.b32.xlu0 %v268, 48
  %v297 = vpop.permute.xlu0 %296
  %vm299 = vcmask 523648
  %300 = vst.msk [vmem:[#allocation2] sm:$0xff] %vm299, %v297
  %302 = vrot.lane.b32.xlu0 %v269, 64
  %v303 = vpop.permute.xlu0 %302
  %vm305 = vcmask 654848
  %306 = vst.msk [vmem:[#allocation2] sm:$0xff] %vm305, %v303
  %308 = vrot.lane.b32.xlu0 %v270, 80
  %v309 = vpop.permute.xlu0 %308
  %vm311 = vcmask 786048
  %312 = vst.msk [vmem:[#allocation2] sm:$0xff] %vm311, %v309
  %314 = vrot.lane.b32.xlu0 %v271, 96
  %v315 = vpop.permute.xlu0 %314
  %vm317 = vcmask 917248
  %318 = vst.msk [vmem:[#allocation2] sm:$0xff] %vm317, %v315
  %320 = vrot.lane.b32.xlu0 %v272, 112
  %v321 = vpop.permute.xlu0 %320
  %vm323 = vcmask 1048448
  %324 = vst.msk [vmem:[#allocation2] sm:$0xff] %vm323, %v321
  %325 = vst.msk [vmem:[#allocation2 + $0x8] sm:$0xff] %vm281, %v273
  %327 = vrot.lane.b32.xlu0 %v274, 16
  %v328 = vpop.permute.xlu0 %327
  %330 = vst.msk [vmem:[#allocation2 + $0x8] sm:$0xff] %vm287, %v328
  %332 = vrot.lane.b32.xlu0 %v275, 32
  %v333 = vpop.permute.xlu0 %332
  %335 = vst.msk [vmem:[#allocation2 + $0x8] sm:$0xff] %vm293, %v333
  %337 = vrot.lane.b32.xlu0 %v276, 48
  %v338 = vpop.permute.xlu0 %337
  %340 = vst.msk [vmem:[#allocation2 + $0x8] sm:$0xff] %vm299, %v338
  %342 = vrot.lane.b32.xlu0 %v277, 64
  %v343 = vpop.permute.xlu0 %342
  %345 = vst.msk [vmem:[#allocation2 + $0x8] sm:$0xff] %vm305, %v343
  %347 = vrot.lane.b32.xlu0 %v278, 80
  %v348 = vpop.permute.xlu0 %347
  %350 = vst.msk [vmem:[#allocation2 + $0x8] sm:$0xff] %vm311, %v348
  %352 = vrot.lane.b32.xlu0 %v279, 96
  %v353 = vpop.permute.xlu0 %352
  %355 = vst.msk [vmem:[#allocation2 + $0x8] sm:$0xff] %vm317, %v353
  %357 = vrot.lane.b32.xlu0 %v280, 112
  %v358 = vpop.permute.xlu0 %357
  %360 = vst.msk [vmem:[#allocation2 + $0x8] sm:$0xff] %vm323, %v358
  %v361 = vld [vmem:[%s2 + $0x20] sm:$0xf]
  %v362 = vld [vmem:[%s2 + $0x24] sm:$0xf]
  %v363 = vld [vmem:[%s2 + $0x28] sm:$0xf]
  %v364 = vld [vmem:[%s2 + $0x2c] sm:$0xf]
  %v365 = vld [vmem:[%s2 + $0x30] sm:$0xf]
  %v366 = vld [vmem:[%s2 + $0x34] sm:$0xf]
  %v367 = vld [vmem:[%s2 + $0x38] sm:$0xf]
  %v368 = vld [vmem:[%s2 + $0x3c] sm:$0xf]
  %v369 = vld [vmem:[%s2 + $0x40] sm:$0xf]
  %v370 = vld [vmem:[%s2 + $0x44] sm:$0xf]
  %v371 = vld [vmem:[%s2 + $0x48] sm:$0xf]
  %v372 = vld [vmem:[%s2 + $0x4c] sm:$0xf]
  %v373 = vld [vmem:[%s2 + $0x50] sm:$0xf]
  %v374 = vld [vmem:[%s2 + $0x54] sm:$0xf]
  %v375 = vld [vmem:[%s2 + $0x58] sm:$0xf]
  %v376 = vld [vmem:[%s2 + $0x5c] sm:$0xf]
  %v377 = vld [vmem:[%s2 + $0x60] sm:$0xf]
  %v378 = vld [vmem:[%s2 + $0x64] sm:$0xf]
  %v379 = vld [vmem:[%s2 + $0x68] sm:$0xf]
  %v380 = vld [vmem:[%s2 + $0x6c] sm:$0xf]
  %v381 = vld [vmem:[%s2 + $0x70] sm:$0xf]
  %v382 = vld [vmem:[%s2 + $0x74] sm:$0xf]
  %v383 = vld [vmem:[%s2 + $0x78] sm:$0xf]
  %v384 = vld [vmem:[%s2 + $0x7c] sm:$0xf]
  %v385 = vld [vmem:[%s2 + $0x80] sm:$0xf]
  %v386 = vld [vmem:[%s2 + $0x84] sm:$0xf]
  %v387 = vld [vmem:[%s2 + $0x88] sm:$0xf]
  %v388 = vld [vmem:[%s2 + $0x8c] sm:$0xf]
  %v389 = vld [vmem:[%s2 + $0x90] sm:$0xf]
  %v390 = vld [vmem:[%s2 + $0x94] sm:$0xf]
  %v391 = vld [vmem:[%s2 + $0x98] sm:$0xf]
  %v392 = vld [vmem:[%s2 + $0x9c] sm:$0xf]
  %v393 = vld [vmem:[#allocation2] sm:$0xff]
  %v394 = vld [vmem:[#allocation2 + $0x8] sm:$0xff]
  %v395 = vpack.c.bf16 %v393, %v393
  %v396 = vpack.c.bf16 %v394, %v394
  %v397 = vld [vmem:[%s3 + $0x1] sm:$0x1]
  %v398 = vlaneseq
  %v399 = vshrl.u32 %v398, 7
  %v400 = vsub.s32 0, %v399
  %v401 = vrot.slane %v397, %v400
  %v434 = vunpack.c.l.b16 %v361
  %v435 = vunpack.c.l.b16 %v362
  %v436 = vunpack.c.l.b16 %v363
  %v437 = vunpack.c.l.b16 %v364
  %v438 = vunpack.c.l.b16 %v365
  %v439 = vunpack.c.l.b16 %v366
  %v440 = vunpack.c.l.b16 %v367
  %v441 = vunpack.c.l.b16 %v368
  %v442 = vunpack.c.l.b16 %v369
  %v443 = vunpack.c.l.b16 %v370
  %v444 = vunpack.c.l.b16 %v371
  %v445 = vunpack.c.l.b16 %v372
  %v446 = vunpack.c.l.b16 %v373
  %v447 = vunpack.c.l.b16 %v374
  %v448 = vunpack.c.l.b16 %v375
  %v449 = vunpack.c.l.b16 %v376
  %v450 = vunpack.c.l.b16 %v377
  %v451 = vunpack.c.l.b16 %v378
  %v452 = vunpack.c.l.b16 %v379
  %v453 = vunpack.c.l.b16 %v380
  %v454 = vunpack.c.l.b16 %v381
  %v455 = vunpack.c.l.b16 %v382
  %v456 = vunpack.c.l.b16 %v383
  %v457 = vunpack.c.l.b16 %v384
  %v458 = vunpack.c.l.b16 %v385
  %v459 = vunpack.c.l.b16 %v386
  %v460 = vunpack.c.l.b16 %v387
  %v461 = vunpack.c.l.b16 %v388
  %v462 = vunpack.c.l.b16 %v389
  %v463 = vunpack.c.l.b16 %v390
  %v464 = vunpack.c.l.b16 %v391
  %v465 = vunpack.c.l.b16 %v392
  %v466 = vpack.c.b16 %v435, %v434
  %v467 = vpack.c.b16 %v437, %v436
  %v468 = vpack.c.b16 %v439, %v438
  %v469 = vpack.c.b16 %v441, %v440
  %v470 = vpack.c.b16 %v443, %v442
  %v471 = vpack.c.b16 %v445, %v444
  %v472 = vpack.c.b16 %v447, %v446
  %v473 = vpack.c.b16 %v449, %v448
  %v474 = vpack.c.b16 %v451, %v450
  %v475 = vpack.c.b16 %v453, %v452
  %v476 = vpack.c.b16 %v455, %v454
  %v477 = vpack.c.b16 %v457, %v456
  %v478 = vpack.c.b16 %v459, %v458
  %v479 = vpack.c.b16 %v461, %v460
  %v480 = vpack.c.b16 %v463, %v462
  %v481 = vpack.c.b16 %v465, %v464
  %498 = vmatprep.subr.bf16.mxu0 0
  %499 = vmatpush1.bf16.msra.mxu0 %v466
  %500 = vmatprep.subr.bf16.mxu0 0
  %501 = vmatpush1.bf16.msra.mxu0 %v467
  %502 = vmatprep.subr.bf16.mxu0 0
  %503 = vmatpush1.bf16.msra.mxu0 %v468
  %504 = vmatprep.subr.bf16.mxu0 0
  %505 = vmatpush1.bf16.msra.mxu0 %v469
  %506 = vmatprep.subr.bf16.mxu0 0
  %507 = vmatpush1.bf16.msra.mxu0 %v470
  %508 = vmatprep.subr.bf16.mxu0 0
  %509 = vmatpush1.bf16.msra.mxu0 %v471
  %510 = vmatprep.subr.bf16.mxu0 0
  %511 = vmatpush1.bf16.msra.mxu0 %v472
  %512 = vmatprep.subr.bf16.mxu0 0
  %513 = vmatpush1.bf16.msra.mxu0 %v473
  %514 = vmatprep.subr.bf16.mxu0 0
  %515 = vmatpush1.bf16.msra.mxu0 %v474
  %516 = vmatprep.subr.bf16.mxu0 0
  %517 = vmatpush1.bf16.msra.mxu0 %v475
  %518 = vmatprep.subr.bf16.mxu0 0
  %519 = vmatpush1.bf16.msra.mxu0 %v476
  %520 = vmatprep.subr.bf16.mxu0 0
  %521 = vmatpush1.bf16.msra.mxu0 %v477
  %522 = vmatprep.subr.bf16.mxu0 0
  %523 = vmatpush1.bf16.msra.mxu0 %v478
  %524 = vmatprep.subr.bf16.mxu0 0
  %525 = vmatpush1.bf16.msra.mxu0 %v479
  %526 = vmatprep.subr.bf16.mxu0 0
  %527 = vmatpush1.bf16.msra.mxu0 %v480
  %528 = vmatprep.subr.bf16.mxu0 0
  %529 = vmatpush1.bf16.msra.mxu0 %v481
  %530 = vmatprep.mubr.bf16.mxu0 %v396
  %531 = vmatmul.mubr.bf16.gmra.mrb[0].mxu0 %v395
  %v532 = vpop.f32.mrb[0].mxu0
  %v533 = vadd.f32 %v401, %v532
  %v534 = vpop.f32.mrb[0].mxu0
  %v535 = vpop.f32.mrb[0].mxu0
  %v536 = vpop.f32.mrb[0].mxu0
  %537 = vdwg.mxu0
  %vm538 = vcmp.ge.f32.partialorder %v533, 0.0
  %v539 = vmul.f32 %v533, 0.2
  %v540 = vsel %vm538, %v533, %v539
  %vm541 = vcmask 254976
  %542 = vst.msk [vmem:[#allocation3] sm:$0x3] %vm541, %v540
  %544 = vrot.lane.b32.xlu0 %v540, 32
  %v545 = vpop.permute.xlu0 %544
  %vm547 = vcmask 519426
  %548 = vst.msk [vmem:[#allocation3 - $0x2] sm:$0xc] %vm547, %v545
  %549 = vrot.lane.b32.xlu0 %v540, 64
  %v550 = vpop.permute.xlu0 %549
  %vm552 = vcmask 783876
  %553 = vst.msk [vmem:[#allocation3 - $0x4] sm:$0x30] %vm552, %v550
  %554 = vrot.lane.b32.xlu0 %v540, 96
  %v555 = vpop.permute.xlu0 %554
  %vm557 = vcmask 1048326
  %558 = vst.msk [vmem:[#allocation3 - $0x6] sm:$0xc0] %vm557, %v555
  %v559 = vld [vmem:[%s2 + $0xa0] sm:$0xf]
  %v560 = vld [vmem:[%s2 + $0xa4] sm:$0xf]
  %v561 = vld [vmem:[%s2 + $0xa8] sm:$0xf]
  %v562 = vld [vmem:[%s2 + $0xac] sm:$0xf]
  %v563 = vld [vmem:[%s2 + $0xb0] sm:$0xf]
  %v564 = vld [vmem:[%s2 + $0xb4] sm:$0xf]
  %v565 = vld [vmem:[%s2 + $0xb8] sm:$0xf]
  %v566 = vld [vmem:[%s2 + $0xbc] sm:$0xf]
  %v567 = vld [vmem:[%s2 + $0xc0] sm:$0xf]
  %v568 = vld [vmem:[%s2 + $0xc4] sm:$0xf]
  %v569 = vld [vmem:[%s2 + $0xc8] sm:$0xf]
  %v570 = vld [vmem:[%s2 + $0xcc] sm:$0xf]
  %v571 = vld [vmem:[%s2 + $0xd0] sm:$0xf]
  %v572 = vld [vmem:[%s2 + $0xd4] sm:$0xf]
  %v573 = vld [vmem:[%s2 + $0xd8] sm:$0xf]
  %v574 = vld [vmem:[%s2 + $0xdc] sm:$0xf]
  %v575 = vld [vmem:[#allocation3] sm:$0x3]
  %v576 = vpack.c.bf16 %v575, %v575
  %v577 = vld [vmem:[%s3 + $0x2] sm:$0x1]
  %v578 = vlaneseq
  %v579 = vshrl.u32 %v578, 7
  %v580 = vsub.s32 0, %v579
  %v581 = vrot.slane %v577, %v580
  %v598 = vunpack.c.l.b16 %v559
  %v599 = vunpack.c.l.b16 %v560
  %v600 = vunpack.c.l.b16 %v561
  %v601 = vunpack.c.l.b16 %v562
  %v602 = vunpack.c.l.b16 %v563
  %v603 = vunpack.c.l.b16 %v564
  %v604 = vunpack.c.l.b16 %v565
  %v605 = vunpack.c.l.b16 %v566
  %v606 = vunpack.c.l.b16 %v567
  %v607 = vunpack.c.l.b16 %v568
  %v608 = vunpack.c.l.b16 %v569
  %v609 = vunpack.c.l.b16 %v570
  %v610 = vunpack.c.l.b16 %v571
  %v611 = vunpack.c.l.b16 %v572
  %v612 = vunpack.c.l.b16 %v573
  %v613 = vunpack.c.l.b16 %v574
  %v614 = vpack.c.b16 %v599, %v598
  %v615 = vpack.c.b16 %v601, %v600
  %v616 = vpack.c.b16 %v603, %v602
  %v617 = vpack.c.b16 %v605, %v604
  %v618 = vpack.c.b16 %v607, %v606
  %v619 = vpack.c.b16 %v609, %v608
  %v620 = vpack.c.b16 %v611, %v610
  %v621 = vpack.c.b16 %v613, %v612
  %630 = vmatprep.subr.bf16.mxu0 0
  %631 = vmatpush1.bf16.msra.mxu0 %v614
  %632 = vmatprep.subr.bf16.mxu0 0
  %633 = vmatpush1.bf16.msra.mxu0 %v615
  %634 = vmatprep.subr.bf16.mxu0 0
  %635 = vmatpush1.bf16.msra.mxu0 %v616
  %636 = vmatprep.subr.bf16.mxu0 0
  %637 = vmatpush1.bf16.msra.mxu0 %v617
  %638 = vmatprep.subr.bf16.mxu0 0
  %639 = vmatpush1.bf16.msra.mxu0 %v618
  %640 = vmatprep.subr.bf16.mxu0 0
  %641 = vmatpush1.bf16.msra.mxu0 %v619
  %642 = vmatprep.subr.bf16.mxu0 0
  %643 = vmatpush1.bf16.msra.mxu0 %v620
  %644 = vmatprep.subr.bf16.mxu0 0
  %645 = vmatpush1.bf16.msra.mxu0 %v621
  %646 = vmatprep.subr.bf16.mxu0 0
  %647 = vmatpush1.bf16.msra.mxu0 0
  %648 = vmatprep.subr.bf16.mxu0 0
  %649 = vmatpush1.bf16.msra.mxu0 0
  %650 = vmatprep.subr.bf16.mxu0 0
  %651 = vmatpush1.bf16.msra.mxu0 0
  %652 = vmatprep.subr.bf16.mxu0 0
  %653 = vmatpush1.bf16.msra.mxu0 0
  %654 = vmatprep.subr.bf16.mxu0 0
  %655 = vmatpush1.bf16.msra.mxu0 0
  %656 = vmatprep.subr.bf16.mxu0 0
  %657 = vmatpush1.bf16.msra.mxu0 0
  %658 = vmatprep.subr.bf16.mxu0 0
  %659 = vmatpush1.bf16.msra.mxu0 0
  %660 = vmatprep.subr.bf16.mxu0 0
  %661 = vmatpush1.bf16.msra.mxu0 0
  %662 = vmatprep.mubr.bf16.mxu0 0
  %663 = vmatmul.mubr.bf16.gmra.mrb[0].mxu0 %v576
  %v664 = vpop.f32.mrb[0].mxu0
  %v665 = vadd.f32 %v581, %v664
  %v666 = vpop.f32.mrb[0].mxu0
  %v667 = vpop.f32.mrb[0].mxu0
  %v668 = vpop.f32.mrb[0].mxu0
  %669 = vdwg.mxu0
  %vm670 = vcmp.ge.f32.partialorder %v665, 0.0
  %v671 = vmul.f32 %v665, 0.2
  %v672 = vsel %vm670, %v665, %v671
  %v673 = vld [vmem:[%s2 + $0xe0] sm:$0xf]
  %v674 = vld [vmem:[%s2 + $0xe4] sm:$0xf]
  %v675 = vld [vmem:[%s2 + $0xe8] sm:$0xf]
  %v676 = vld [vmem:[%s2 + $0xec] sm:$0xf]
  %v677 = vld [vmem:[%s2 + $0xf0] sm:$0xf]
  %v678 = vld [vmem:[%s2 + $0xf4] sm:$0xf]
  %v679 = vld [vmem:[%s2 + $0xf8] sm:$0xf]
  %v680 = vld [vmem:[%s2 + $0xfc] sm:$0xf]
  %v681 = vld [vmem:[%s2 + $0x100] sm:$0xf]
  %v682 = vld [vmem:[%s2 + $0x104] sm:$0xf]
  %v683 = vld [vmem:[%s2 + $0x108] sm:$0xf]
  %v684 = vld [vmem:[%s2 + $0x10c] sm:$0xf]
  %v685 = vld [vmem:[%s1] sm:$0x1]
  %v686 = vld [vmem:[%s3 + $0x3] sm:$0x1]
  %v687 = vlaneseq
  %v688 = vshrl.u32 %v687, 7
  %v689 = vsub.s32 0, %v688
  %v690 = vrot.slane %v686, %v689
  %v699 = vunpack.c.l.b16 %v673
  %v700 = vunpack.c.l.b16 %v674
  %v701 = vunpack.c.l.b16 %v675
  %v702 = vunpack.c.l.b16 %v676
  %v703 = vunpack.c.l.b16 %v677
  %v704 = vunpack.c.l.b16 %v678
  %v705 = vunpack.c.l.b16 %v679
  %v706 = vunpack.c.l.b16 %v680
  %v707 = vpack.c.b16 %v700, %v699
  %v708 = vpack.c.b16 %v702, %v701
  %v709 = vpack.c.b16 %v704, %v703
  %v710 = vpack.c.b16 %v706, %v705
  %v716 = vsel %vm111, %v685, 0
  %718 = vmatprep.subr.bf16.mxu0 0
  %719 = vmatpush1.bf16.msra.mxu0 %v707
  %720 = vmatprep.subr.bf16.mxu0 0
  %721 = vmatpush1.bf16.msra.mxu0 %v708
  %722 = vmatprep.subr.bf16.mxu0 0
  %723 = vmatpush1.bf16.msra.mxu0 %v709
  %724 = vmatprep.subr.bf16.mxu0 0
  %725 = vmatpush1.bf16.msra.mxu0 %v710
  %726 = vmatprep.subr.bf16.mxu0 0
  %727 = vmatpush1.bf16.msra.mxu0 0
  %728 = vmatprep.subr.bf16.mxu0 0
  %729 = vmatpush1.bf16.msra.mxu0 0
  %730 = vmatprep.subr.bf16.mxu0 0
  %731 = vmatpush1.bf16.msra.mxu0 0
  %732 = vmatprep.subr.bf16.mxu0 0
  %733 = vmatpush1.bf16.msra.mxu0 0
  %734 = vmatprep.subr.bf16.mxu0 0
  %735 = vmatpush1.bf16.msra.mxu0 0
  %736 = vmatprep.subr.bf16.mxu0 0
  %737 = vmatpush1.bf16.msra.mxu0 0
  %738 = vmatprep.subr.bf16.mxu0 0
  %739 = vmatpush1.bf16.msra.mxu0 0
  %740 = vmatprep.subr.bf16.mxu0 0
  %741 = vmatpush1.bf16.msra.mxu0 0
  %742 = vmatprep.subr.bf16.mxu0 0
  %743 = vmatpush1.bf16.msra.mxu0 0
  %744 = vmatprep.subr.bf16.mxu0 0
  %745 = vmatpush1.bf16.msra.mxu0 0
  %746 = vmatprep.subr.bf16.mxu0 0
  %747 = vmatpush1.bf16.msra.mxu0 0
  %748 = vmatprep.subr.bf16.mxu0 0
  %749 = vmatpush1.bf16.msra.mxu0 0
  %750 = vmatprep.mubr.bf16.mxu0 0
  %751 = vmatmul.mubr.bf16.gmra.mrb[0].mxu0 %v716
  %v752 = vpop.f32.mrb[0].mxu0
  %v753 = vadd.f32 %v690, %v752
  %v754 = vpop.f32.mrb[0].mxu0
  %v755 = vpop.f32.mrb[0].mxu0
  %v756 = vpop.f32.mrb[0].mxu0
  %757 = vdwg.mxu0
  %vm758 = vcmp.ge.f32.partialorder %v753, 0.0
  %v759 = vmul.f32 %v753, 0.2
  %v760 = vsel %vm758, %v753, %v759
  %v761 = vpack.c.bf16 %v760, %v760
  %v762 = vld [vmem:[%s3 + $0x4] sm:$0x1]
  %v763 = vlaneseq
  %v764 = vshrl.u32 %v763, 7
  %v765 = vsub.s32 0, %v764
  %v766 = vrot.slane %v762, %v765
  %v771 = vunpack.c.l.b16 %v681
  %v772 = vunpack.c.l.b16 %v682
  %v773 = vunpack.c.l.b16 %v683
  %v774 = vunpack.c.l.b16 %v684
  %v775 = vpack.c.b16 %v772, %v771
  %v776 = vpack.c.b16 %v774, %v773
  %vm779 = vcmask 261120
  %v781 = vsel %vm779, %v761, 0
  %783 = vmatprep.subr.bf16.mxu0 0
  %784 = vmatpush1.bf16.msra.mxu0 %v775
  %785 = vmatprep.subr.bf16.mxu0 0
  %786 = vmatpush1.bf16.msra.mxu0 %v776
  %787 = vmatprep.subr.bf16.mxu0 0
  %788 = vmatpush1.bf16.msra.mxu0 0
  %789 = vmatprep.subr.bf16.mxu0 0
  %790 = vmatpush1.bf16.msra.mxu0 0
  %791 = vmatprep.subr.bf16.mxu0 0
  %792 = vmatpush1.bf16.msra.mxu0 0
  %793 = vmatprep.subr.bf16.mxu0 0
  %794 = vmatpush1.bf16.msra.mxu0 0
  %795 = vmatprep.subr.bf16.mxu0 0
  %796 = vmatpush1.bf16.msra.mxu0 0
  %797 = vmatprep.subr.bf16.mxu0 0
  %798 = vmatpush1.bf16.msra.mxu0 0
  %799 = vmatprep.subr.bf16.mxu0 0
  %800 = vmatpush1.bf16.msra.mxu0 0
  %801 = vmatprep.subr.bf16.mxu0 0
  %802 = vmatpush1.bf16.msra.mxu0 0
  %803 = vmatprep.subr.bf16.mxu0 0
  %804 = vmatpush1.bf16.msra.mxu0 0
  %805 = vmatprep.subr.bf16.mxu0 0
  %806 = vmatpush1.bf16.msra.mxu0 0
  %807 = vmatprep.subr.bf16.mxu0 0
  %808 = vmatpush1.bf16.msra.mxu0 0
  %809 = vmatprep.subr.bf16.mxu0 0
  %810 = vmatpush1.bf16.msra.mxu0 0
  %811 = vmatprep.subr.bf16.mxu0 0
  %812 = vmatpush1.bf16.msra.mxu0 0
  %813 = vmatprep.subr.bf16.mxu0 0
  %814 = vmatpush1.bf16.msra.mxu0 0
  %815 = vmatprep.mubr.bf16.mxu0 0
  %816 = vmatmul.mubr.bf16.gmra.mrb[0].mxu0 %v781
  %v817 = vpop.f32.mrb[0].mxu0
  %v818 = vadd.f32 %v766, %v817
  %v819 = vpop.f32.mrb[0].mxu0
  %v820 = vpop.f32.mrb[0].mxu0
  %v821 = vpop.f32.mrb[0].mxu0
  %822 = vdwg.mxu0
  %vm823 = vcmp.ge.f32.partialorder %v818, 0.0
  %v824 = vmul.f32 %v818, 0.2
  %v825 = vsel %vm823, %v818, %v824
  %v826 = vld [vmem:[%s2 + $0x110] sm:$0xf]
  %v827 = vld [vmem:[%s2 + $0x114] sm:$0xf]
  %v828 = vld [vmem:[%s2 + $0x118] sm:$0xf]
  %v829 = vld [vmem:[%s2 + $0x11c] sm:$0xf]
  %v830 = vld [vmem:[%s2 + $0x120] sm:$0xf]
  %v831 = vld [vmem:[%s2 + $0x124] sm:$0xf]
  %v832 = vld [vmem:[%s2 + $0x128] sm:$0xf]
  %v833 = vld [vmem:[%s2 + $0x12c] sm:$0xf]
  %v834 = vpack.c.bf16 %v672, %v672
  %v835 = vpack.c.bf16 %v825, %v825
  %v840 = vunpack.c.l.b16 %v830
  %v841 = vunpack.c.l.b16 %v831
  %v842 = vunpack.c.l.b16 %v832
  %v843 = vunpack.c.l.b16 %v833
  %v844 = vpack.c.b16 %v841, %v840
  %v845 = vpack.c.b16 %v843, %v842
  %v849 = vsel %vm779, %v835, 0
  %851 = vmatprep.subr.bf16.mxu0 0
  %852 = vmatpush1.bf16.msra.mxu0 %v844
  %853 = vmatprep.subr.bf16.mxu0 0
  %854 = vmatpush1.bf16.msra.mxu0 %v845
  %855 = vmatprep.subr.bf16.mxu0 0
  %856 = vmatpush1.bf16.msra.mxu0 0
  %857 = vmatprep.subr.bf16.mxu0 0
  %858 = vmatpush1.bf16.msra.mxu0 0
  %859 = vmatprep.subr.bf16.mxu0 0
  %860 = vmatpush1.bf16.msra.mxu0 0
  %861 = vmatprep.subr.bf16.mxu0 0
  %862 = vmatpush1.bf16.msra.mxu0 0
  %863 = vmatprep.subr.bf16.mxu0 0
  %864 = vmatpush1.bf16.msra.mxu0 0
  %865 = vmatprep.subr.bf16.mxu0 0
  %866 = vmatpush1.bf16.msra.mxu0 0
  %867 = vmatprep.subr.bf16.mxu0 0
  %868 = vmatpush1.bf16.msra.mxu0 0
  %869 = vmatprep.subr.bf16.mxu0 0
  %870 = vmatpush1.bf16.msra.mxu0 0
  %871 = vmatprep.subr.bf16.mxu0 0
  %872 = vmatpush1.bf16.msra.mxu0 0
  %873 = vmatprep.subr.bf16.mxu0 0
  %874 = vmatpush1.bf16.msra.mxu0 0
  %875 = vmatprep.subr.bf16.mxu0 0
  %876 = vmatpush1.bf16.msra.mxu0 0
  %877 = vmatprep.subr.bf16.mxu0 0
  %878 = vmatpush1.bf16.msra.mxu0 0
  %879 = vmatprep.subr.bf16.mxu0 0
  %880 = vmatpush1.bf16.msra.mxu0 0
  %881 = vmatprep.subr.bf16.mxu0 0
  %882 = vmatpush1.bf16.msra.mxu0 0
  %883 = vmatprep.mubr.bf16.mxu0 0
  %884 = vmatmul.mubr.bf16.gmra.mrb[0].mxu0 %v849
  %v885 = vpop.f32.mrb[0].mxu0
  %v886 = vadd.f32 0.0, %v885
  %v887 = vpop.f32.mrb[0].mxu0
  %v888 = vpop.f32.mrb[0].mxu0
  %v889 = vpop.f32.mrb[0].mxu0
  %890 = vdwg.mxu0
  %v895 = vunpack.c.l.b16 %v826
  %v896 = vunpack.c.l.b16 %v827
  %v897 = vunpack.c.l.b16 %v828
  %v898 = vunpack.c.l.b16 %v829
  %v899 = vpack.c.b16 %v896, %v895
  %v900 = vpack.c.b16 %v898, %v897
  %v904 = vsel %vm779, %v834, 0
  %906 = vmatprep.subr.bf16.mxu0 0
  %907 = vmatpush1.bf16.msra.mxu0 %v899
  %908 = vmatprep.subr.bf16.mxu0 0
  %909 = vmatpush1.bf16.msra.mxu0 %v900
  %910 = vmatprep.subr.bf16.mxu0 0
  %911 = vmatpush1.bf16.msra.mxu0 0
  %912 = vmatprep.subr.bf16.mxu0 0
  %913 = vmatpush1.bf16.msra.mxu0 0
  %914 = vmatprep.subr.bf16.mxu0 0
  %915 = vmatpush1.bf16.msra.mxu0 0
  %916 = vmatprep.subr.bf16.mxu0 0
  %917 = vmatpush1.bf16.msra.mxu0 0
  %918 = vmatprep.subr.bf16.mxu0 0
  %919 = vmatpush1.bf16.msra.mxu0 0
  %920 = vmatprep.subr.bf16.mxu0 0
  %921 = vmatpush1.bf16.msra.mxu0 0
  %922 = vmatprep.subr.bf16.mxu0 0
  %923 = vmatpush1.bf16.msra.mxu0 0
  %924 = vmatprep.subr.bf16.mxu0 0
  %925 = vmatpush1.bf16.msra.mxu0 0
  %926 = vmatprep.subr.bf16.mxu0 0
  %927 = vmatpush1.bf16.msra.mxu0 0
  %928 = vmatprep.subr.bf16.mxu0 0
  %929 = vmatpush1.bf16.msra.mxu0 0
  %930 = vmatprep.subr.bf16.mxu0 0
  %931 = vmatpush1.bf16.msra.mxu0 0
  %932 = vmatprep.subr.bf16.mxu0 0
  %933 = vmatpush1.bf16.msra.mxu0 0
  %934 = vmatprep.subr.bf16.mxu0 0
  %935 = vmatpush1.bf16.msra.mxu0 0
  %936 = vmatprep.subr.bf16.mxu0 0
  %937 = vmatpush1.bf16.msra.mxu0 0
  %938 = vmatprep.mubr.bf16.mxu0 0
  %939 = vmatmul.mubr.bf16.gmra.mrb[0].mxu0 %v904
  %v940 = vpop.f32.mrb[0].mxu0
  %v941 = vadd.f32 %v886, %v940
  %v942 = vpop.f32.mrb[0].mxu0
  %v943 = vpop.f32.mrb[0].mxu0
  %v944 = vpop.f32.mrb[0].mxu0
  %945 = vdwg.mxu0
  %v946 = vld [vmem:[%s3 + $0x5] sm:$0x1]
  %v947 = vlaneseq
  %v948 = vshrl.u32 %v947, 7
  %v949 = vsub.s32 0, %v948
  %v950 = vrot.slane %v946, %v949
  %v951 = vadd.f32 %v941, %v950
  %vm952 = vcmp.ge.f32.partialorder %v951, 0.0
  %v953 = vmul.f32 %v951, 0.2
  %v954 = vsel %vm952, %v951, %v953
  %v955 = vld [vmem:[%s3 + $0x6] sm:$0x1]
  %v956 = vlaneseq
  %v957 = vshrl.u32 %v956, 7
  %v958 = vsub.s32 0, %v957
  %v959 = vrot.slane %v955, %v958
  %v960 = vmul.f32 %v954, %v959
  %v961 = vsel %vm541, %v960, 0.0
  %962 = vadd.xlane.f32.xlu0 %v961
  %v963 = vpop.xlane.xlu0 %962
  %v964 = vld [vmem:[%s3 + $0x7] sm:$0x1]
  %v965 = vlaneseq
  %v966 = vshrl.u32 %v965, 7
  %v967 = vsub.s32 0, %v966
  %v968 = vrot.slane %v964, %v967
  %v969 = vadd.f32 %v963, %v968
  %vm970 = vcmask 1024
  %971 = vst.msk [vmem:[%s4] sm:$0x3] %vm970, %v969
  // Predicated region
  $region18: #{base_discriminator_forward.1} parent=0 // pred_check
    _
  $region19: #{base_discriminator_forward.1} parent=0 // pred_check_branch
    %973 = sbr.rel (0) target = $region21
  $region20: #{base_discriminator_forward.1} parent=0 // pred_region
    _
  $region21: #{base_discriminator_forward.1} parent=0 // pred_fallthru
    _
  // Predicated region
  $region22: #{base_discriminator_forward.1} parent=0 // pred_check
    _
  $region23: #{base_discriminator_forward.1} parent=0 // pred_check_branch
    %975 = sbr.rel (0) target = $region25
  $region24: #{base_discriminator_forward.1} parent=0 // pred_region
    _
  $region25: #{base_discriminator_forward.1} parent=0 // pred_fallthru
    _

</llo_original>
